<compile_context>
chip_gen: v7x
topology: tpu7x:2x2x1
jax: 0.10.0
libtpu: 0.0.40
codegen_flags: <defaults>
</compile_context>

<pallas_src>
import functools

import jax
import jax.numpy as jnp
from jax import lax
from jax.experimental import pallas as pl
from jax.experimental.pallas import tpu as pltpu


def _fire_kernel(c_ref, rnorm_ref, w1_ref, b1_ref, w2_ref, o_ref, hid_ref, *,
                 rq, seq_len):
    """Computes `rq` query rows of the FIRE bias, head-major and lane-dense.

    o_ref block : (heads, rq*seq_len) -- flat view of (heads, S, S); column
                  r*seq_len + k holds bias[head, row0 + r, k].
    hid_ref     : (mlp_width+1, rq*seq_len) VMEM scratch staging the hidden
                  activations; its last row is the constant 1 that folds b2
                  into the matmul.
    """
    cc = c_ref[0]                         # scalar c
    w1 = w1_ref[...]                      # (mlp_w+1, 1) f32; last entry 0
    b1 = b1_ref[...]                      # (mlp_w+1, 1) f32; last entry 1
    w2 = w2_ref[...]                      # (heads, mlp_w+1); last col = b2

    row0 = pl.program_id(0) * rq          # first query row of this block

    # Key positions (lane-dense), shared by all rows of this block.
    k_pos = lax.broadcasted_iota(jnp.int32, (1, seq_len), 1).astype(jnp.float32)

    # Stage all rq rows of hidden activations into the VMEM scratch ...
    for r in range(rq):                                           # static unroll
        q = row0 + r
        q_f = q.astype(jnp.float32)
        rnorm = rnorm_ref[q]              # 1 / (log(|c*max(q,thr)|+1) + eps)

        rel_log = jnp.log(jnp.abs(cc * (q_f - k_pos)) + 1.0)      # (1, S)
        # rnorm folded into the first-layer weights (33 scalar muls instead of
        # an extra (1,S) multiply per row).
        w1r = w1 * rnorm                                          # (mlp_w+1, 1)
        hid = jnp.maximum(rel_log * w1r + b1, 0.0)                # (mlp_w+1, S)
        hid_ref[:, r * seq_len:(r + 1) * seq_len] = hid.astype(hid_ref.dtype)

    # ... then one dot (b2 folded via the ones row) and one full-width store.
    out = jnp.dot(w2, hid_ref[...], preferred_element_type=jnp.float32)
    o_ref[...] = out.astype(o_ref.dtype)


def fire_bias_pallas(seq_len, params, *, num_heads=12, mlp_width=32, eps=1e-6,
                     out_dtype=jnp.float32, mxu_dtype=jnp.bfloat16):
    """Returns the FIRE attention bias of shape [1, num_heads, seq_len, seq_len].

    out_dtype:  dtype of the emitted bias (bf16 halves HBM writeback if the
                attention consumer tolerates it; f32 matches PyTorch exactly).
    mxu_dtype:  dtype of the hid scratch / w2 fed to the MXU (bf16 avoids f32
                pass-splitting; use f32 for bit-faithful parity checks).
    """
    c = params["c"].astype(jnp.float32)
    threshold = jnp.abs(params["L_multiplier"] * params["init_L"]).astype(jnp.float32)

    # Per-query-row normalizer reciprocal (S values; the S^2 rel_log stays in-kernel).
    positions = jnp.arange(seq_len, dtype=jnp.float32)
    norm_log = jnp.log(jnp.abs(c * jnp.maximum(positions, threshold)) + 1.0)
    rnorm = 1.0 / (norm_log + jnp.float32(eps))                       # (S,)

    # MLP params: features on sublanes; b2 folded via a constant ones row
    # (w1 row 32 = 0, b1 row 32 = 1  =>  hid row 32 == 1; w2 last column = b2).
    w1c = jnp.concatenate(
        [params["w1"].reshape(mlp_width, 1).astype(jnp.float32),
         jnp.zeros((1, 1), jnp.float32)], axis=0)                     # (mlp_w+1, 1)
    b1c = jnp.concatenate(
        [params["b1"].reshape(mlp_width, 1).astype(jnp.float32),
         jnp.ones((1, 1), jnp.float32)], axis=0)                      # (mlp_w+1, 1)
    w2b = jnp.concatenate(
        [params["w2"].T, params["b2"].reshape(num_heads, 1)],
        axis=1).astype(mxu_dtype)                                     # (heads, mlp_w+1)

    out_isize = jnp.dtype(out_dtype).itemsize
    mxu_isize = jnp.dtype(mxu_dtype).itemsize

    def _sub(itemsize):                      # sublane tile for a given itemsize
        return {4: 8, 2: 16, 1: 32}.get(itemsize, 8)

    def _rup(x, m):
        return (x + m - 1) // m * m

    def _vmem_estimate(rq_):
        l = rq_ * seq_len
        out_blk = _rup(num_heads, _sub(out_isize)) * l * out_isize    # 1 output block
        hid_blk = _rup(mlp_width + 1, _sub(mxu_isize)) * l * mxu_isize
        dot_tmp = _rup(num_heads, 8) * l * 4                          # f32 dot result
        return 2 * out_blk + hid_blk + dot_tmp + (8 << 20)            # 2x = dbl buffer

    try:
        vmem_cap = pltpu.get_tpu_info().vmem_capacity_bytes
    except Exception:  # pragma: no cover - conservative fallback (v7x-sized)
        vmem_cap = 64 << 20

    if seq_len % 128 == 0:
        rq = 16                              # rq query rows (full key axis) per step
        while rq > 1 and (seq_len % rq != 0 or _vmem_estimate(rq) > vmem_cap):
            rq //= 2
    else:
        rq = seq_len                         # single block; only valid for small S
        if _vmem_estimate(rq) > vmem_cap:
            raise ValueError(
                "seq_len must be a multiple of 128 (or small enough for one block)")

    l_blk = rq * seq_len
    grid = (seq_len // rq,)
    vmem_limit = int(min(max(_vmem_estimate(rq), 32 << 20), vmem_cap))

    kernel = functools.partial(_fire_kernel, rq=rq, seq_len=seq_len)

    out_flat = pl.pallas_call(
        kernel,
        out_shape=jax.ShapeDtypeStruct((num_heads, seq_len * seq_len), out_dtype),
        grid_spec=pltpu.PrefetchScalarGridSpec(
            num_scalar_prefetch=0,
            grid=grid,
            in_specs=[
                pl.BlockSpec(memory_space=pltpu.SMEM),                       # c (1,)
                pl.BlockSpec(memory_space=pltpu.SMEM),                       # rnorm (S,)
                pl.BlockSpec((mlp_width + 1, 1), lambda i: (0, 0)),          # w1 col
                pl.BlockSpec((mlp_width + 1, 1), lambda i: (0, 0)),          # b1 col
                pl.BlockSpec((num_heads, mlp_width + 1), lambda i: (0, 0)),  # [w2^T|b2]
            ],
            out_specs=pl.BlockSpec((num_heads, l_blk), lambda i: (0, i)),
            scratch_shapes=[pltpu.VMEM((mlp_width + 1, l_blk), mxu_dtype)],
        ),
        # Single grid axis is "parallel" so it can shard across v7x's two TCs.
        compiler_params=pltpu.CompilerParams(
            dimension_semantics=("parallel",),
            vmem_limit_bytes=vmem_limit),
    )(jnp.reshape(c, (1,)), rnorm, w1c, b1c, w2b)

    # Free (metadata-only) reshape to the PyTorch output layout [1, H, S, S].
    return out_flat.reshape(num_heads, seq_len, seq_len)[None]


def fire_bias_reference(seq_len, params, *, eps=1e-6):
    """Pure-JAX reference mirroring the PyTorch forward (eval-mode positions)."""
    positions = jnp.arange(seq_len, dtype=jnp.float32)
    rel = positions[:, None] - positions[None, :]
    threshold = jnp.abs(params["L_multiplier"] * params["init_L"])
    pos_norm = jnp.maximum(positions, threshold)[:, None]
    rel = jnp.log(jnp.abs(params["c"] * rel) + 1.0)
    pos_norm = jnp.log(jnp.abs(params["c"] * pos_norm) + 1.0)
    nd = rel / (pos_norm + eps)
    h = jnp.maximum(nd[..., None] * params["w1"][0] + params["b1"][0], 0.0)
    out = h @ params["w2"] + params["b2"][0]
    return jnp.transpose(out, (2, 0, 1))[None]


def init_fire_params(key, *, num_heads=12, mlp_width=32, init_c=0.1, init_L=512.0):
    k1, k2, k3, k4 = jax.random.split(key, 4)
    bound1 = 1.0                      # fan_in = 1
    bound2 = 1.0 / jnp.sqrt(mlp_width)
    return {
        "c": jnp.float32(init_c),
        "init_L": jnp.float32(init_L),
        "L_multiplier": jnp.float32(1.0),
        "w1": jax.random.uniform(k1, (1, mlp_width), jnp.float32, -bound1, bound1),
        "b1": jax.random.uniform(k2, (1, mlp_width), jnp.float32, -bound1, bound1),
        "w2": jax.random.uniform(k3, (mlp_width, num_heads), jnp.float32, -bound2, bound2),
        "b2": jax.random.uniform(k4, (1, num_heads), jnp.float32, -bound2, bound2),
    }


if __name__ == "__main__":
    key = jax.random.PRNGKey(0)
    kx, kp = jax.random.split(key)

    # input x: [bsz, seq_len, hidden_dim] -- only seq_len is used by FIRE.forward
    bsz, seq_len, hidden = 2, 8, 32
    num_heads, mlp_width = 12, 32
    x = jax.random.normal(kx, (bsz, seq_len, hidden), jnp.float32)

    params = init_fire_params(kp, num_heads=num_heads, mlp_width=mlp_width)

    # 1) Exact-precision path (f32 MXU inputs, f32 output): parity vs reference.
    bias = fire_bias_pallas(x.shape[1], params, num_heads=num_heads,
                            mlp_width=mlp_width,
                            out_dtype=jnp.float32, mxu_dtype=jnp.float32)
    bias = jax.block_until_ready(bias)
    ref = fire_bias_reference(x.shape[1], params)
    assert bias.shape == (1, num_heads, seq_len, seq_len), bias.shape
    assert jnp.allclose(bias, ref, atol=1e-4, rtol=1e-4), "mismatch vs reference (S=8, f32)"

    # 2) Default fast path (bf16 MXU inputs, f32 output), tiled seq_len % 128 == 0.
    s2 = 256
    bias2 = jax.block_until_ready(
        fire_bias_pallas(s2, params, num_heads=num_heads, mlp_width=mlp_width))
    ref2 = fire_bias_reference(s2, params)
    assert bias2.shape == (1, num_heads, s2, s2), bias2.shape
    assert jnp.allclose(bias2, ref2, atol=3e-2, rtol=3e-2), "mismatch vs reference (S=256)"

    # 3) bf16 output (halves HBM writeback when the attention consumer allows it).
    bias3 = jax.block_until_ready(
        fire_bias_pallas(s2, params, num_heads=num_heads, mlp_width=mlp_width,
                         out_dtype=jnp.bfloat16))
    assert bias3.dtype == jnp.bfloat16
    assert jnp.allclose(bias3.astype(jnp.float32), ref2, atol=3e-2, rtol=3e-2), \
        "mismatch vs reference (S=256, bf16 out)"

    print("KERNEL_OK")
</pallas_src>

<mosaic_0001>
module attributes {stable_mosaic.version = 11 : i64} {
  func.func @_fire_kernel(%arg0: i32, %arg1: memref<1xf32, #tpu.memory_space<smem>>, %arg2: memref<8xf32, #tpu.memory_space<smem>>, %arg3: memref<33x1xf32, #tpu.memory_space<vmem>>, %arg4: memref<33x1xf32, #tpu.memory_space<vmem>>, %arg5: memref<12x33xf32, #tpu.memory_space<vmem>>, %arg6: memref<12x64xf32, #tpu.memory_space<vmem>>, %arg7: memref<33x64xf32, #tpu.memory_space<vmem>>) attributes {dimension_semantics = [#tpu.dimension_semantics<parallel>], iteration_bounds = array<i64: 1>, scalar_prefetch = 0 : i64, scratch_operands = 1 : i64, tpu.core_type = #tpu.core_type<tc>, window_params = [{transform_indices = @transform_0, window_bounds = array<i64: 1>}, {transform_indices = @transform_1, window_bounds = array<i64: 8>}, {pipeline_mode = #tpu.pipeline_mode<synchronous>, transform_indices = @transform_2, window_bounds = array<i64: 33, 1>}, {pipeline_mode = #tpu.pipeline_mode<synchronous>, transform_indices = @transform_3, window_bounds = array<i64: 33, 1>}, {pipeline_mode = #tpu.pipeline_mode<synchronous>, transform_indices = @transform_4, window_bounds = array<i64: 12, 33>}, {transform_indices = @transform_5, window_bounds = array<i64: 12, 64>}]} {
    %c0 = arith.constant 0 : index
    %0 = memref.load %arg1[%c0] : memref<1xf32, #tpu.memory_space<smem>>
    %c0_0 = arith.constant 0 : index
    %c0_1 = arith.constant 0 : index
    %1 = vector.load %arg3[%c0_0, %c0_1] : memref<33x1xf32, #tpu.memory_space<vmem>>, vector<33x1xf32>
    %c0_2 = arith.constant 0 : index
    %c0_3 = arith.constant 0 : index
    %2 = vector.load %arg4[%c0_2, %c0_3] : memref<33x1xf32, #tpu.memory_space<vmem>>, vector<33x1xf32>
    %c0_4 = arith.constant 0 : index
    %c0_5 = arith.constant 0 : index
    %3 = vector.load %arg5[%c0_4, %c0_5] : memref<12x33xf32, #tpu.memory_space<vmem>>, vector<12x33xf32>
    %c8_i32 = arith.constant 8 : i32
    %4 = arith.muli %arg0, %c8_i32 : i32
    %5 = tpu.iota {dimensions = array<i32: 1>} : vector<1x8xi32>
    %6 = arith.sitofp %5 : vector<1x8xi32> to vector<1x8xf32>
    %c0_i32 = arith.constant 0 : i32
    %7 = arith.addi %4, %c0_i32 : i32
    %8 = arith.sitofp %7 : i32 to f32
    %9 = arith.index_cast %7 : i32 to index
    %10 = memref.load %arg2[%9] : memref<8xf32, #tpu.memory_space<smem>>
    %11 = vector.broadcast %8 : f32 to vector<1x8xf32>
    %12 = arith.subf %11, %6 : vector<1x8xf32>
    %13 = vector.broadcast %0 : f32 to vector<1x8xf32>
    %14 = arith.mulf %13, %12 : vector<1x8xf32>
    %15 = math.absf %14 : vector<1x8xf32>
    %cst = arith.constant 1.000000e+00 : f32
    %16 = vector.broadcast %cst : f32 to vector<1x8xf32>
    %17 = arith.addf %15, %16 : vector<1x8xf32>
    %18 = math.log %17 : vector<1x8xf32>
    %19 = vector.broadcast %10 : f32 to vector<33x1xf32>
    %20 = arith.mulf %1, %19 : vector<33x1xf32>
    %21 = vector.broadcast %18 : vector<1x8xf32> to vector<33x8xf32>
    %22 = vector.broadcast %20 : vector<33x1xf32> to vector<33x8xf32>
    %23 = arith.mulf %21, %22 : vector<33x8xf32>
    %24 = vector.broadcast %2 : vector<33x1xf32> to vector<33x8xf32>
    %25 = arith.addf %23, %24 : vector<33x8xf32>
    %cst_6 = arith.constant 0.000000e+00 : f32
    %26 = vector.broadcast %cst_6 : f32 to vector<33x8xf32>
    %27 = arith.maximumf %25, %26 : vector<33x8xf32>
    %c0_7 = arith.constant 0 : index
    %c0_8 = arith.constant 0 : index
    %28 = vector.load %arg7[%c0_7, %c0_8] : memref<33x64xf32, #tpu.memory_space<vmem>>, vector<33x8xf32>
    tpu.vector_store %arg7[%c0_7, %c0_8], %27 {strides = array<i32>} : memref<33x64xf32, #tpu.memory_space<vmem>>, vector<33x8xf32>,
    %c1_i32 = arith.constant 1 : i32
    %29 = arith.addi %4, %c1_i32 : i32
    %30 = arith.sitofp %29 : i32 to f32
    %31 = arith.index_cast %29 : i32 to index
    %32 = memref.load %arg2[%31] : memref<8xf32, #tpu.memory_space<smem>>
    %33 = vector.broadcast %30 : f32 to vector<1x8xf32>
    %34 = arith.subf %33, %6 : vector<1x8xf32>
    %35 = vector.broadcast %0 : f32 to vector<1x8xf32>
    %36 = arith.mulf %35, %34 : vector<1x8xf32>
    %37 = math.absf %36 : vector<1x8xf32>
    %cst_9 = arith.constant 1.000000e+00 : f32
    %38 = vector.broadcast %cst_9 : f32 to vector<1x8xf32>
    %39 = arith.addf %37, %38 : vector<1x8xf32>
    %40 = math.log %39 : vector<1x8xf32>
    %41 = vector.broadcast %32 : f32 to vector<33x1xf32>
    %42 = arith.mulf %1, %41 : vector<33x1xf32>
    %43 = vector.broadcast %40 : vector<1x8xf32> to vector<33x8xf32>
    %44 = vector.broadcast %42 : vector<33x1xf32> to vector<33x8xf32>
    %45 = arith.mulf %43, %44 : vector<33x8xf32>
    %46 = vector.broadcast %2 : vector<33x1xf32> to vector<33x8xf32>
    %47 = arith.addf %45, %46 : vector<33x8xf32>
    %cst_10 = arith.constant 0.000000e+00 : f32
    %48 = vector.broadcast %cst_10 : f32 to vector<33x8xf32>
    %49 = arith.maximumf %47, %48 : vector<33x8xf32>
    %c0_11 = arith.constant 0 : index
    %c8 = arith.constant 8 : index
    %50 = vector.load %arg7[%c0_11, %c8] : memref<33x64xf32, #tpu.memory_space<vmem>>, vector<33x8xf32>
    tpu.vector_store %arg7[%c0_11, %c8], %49 {strides = array<i32>} : memref<33x64xf32, #tpu.memory_space<vmem>>, vector<33x8xf32>,
    %c2_i32 = arith.constant 2 : i32
    %51 = arith.addi %4, %c2_i32 : i32
    %52 = arith.sitofp %51 : i32 to f32
    %53 = arith.index_cast %51 : i32 to index
    %54 = memref.load %arg2[%53] : memref<8xf32, #tpu.memory_space<smem>>
    %55 = vector.broadcast %52 : f32 to vector<1x8xf32>
    %56 = arith.subf %55, %6 : vector<1x8xf32>
    %57 = vector.broadcast %0 : f32 to vector<1x8xf32>
    %58 = arith.mulf %57, %56 : vector<1x8xf32>
    %59 = math.absf %58 : vector<1x8xf32>
    %cst_12 = arith.constant 1.000000e+00 : f32
    %60 = vector.broadcast %cst_12 : f32 to vector<1x8xf32>
    %61 = arith.addf %59, %60 : vector<1x8xf32>
    %62 = math.log %61 : vector<1x8xf32>
    %63 = vector.broadcast %54 : f32 to vector<33x1xf32>
    %64 = arith.mulf %1, %63 : vector<33x1xf32>
    %65 = vector.broadcast %62 : vector<1x8xf32> to vector<33x8xf32>
    %66 = vector.broadcast %64 : vector<33x1xf32> to vector<33x8xf32>
    %67 = arith.mulf %65, %66 : vector<33x8xf32>
    %68 = vector.broadcast %2 : vector<33x1xf32> to vector<33x8xf32>
    %69 = arith.addf %67, %68 : vector<33x8xf32>
    %cst_13 = arith.constant 0.000000e+00 : f32
    %70 = vector.broadcast %cst_13 : f32 to vector<33x8xf32>
    %71 = arith.maximumf %69, %70 : vector<33x8xf32>
    %c0_14 = arith.constant 0 : index
    %c16 = arith.constant 16 : index
    %72 = vector.load %arg7[%c0_14, %c16] : memref<33x64xf32, #tpu.memory_space<vmem>>, vector<33x8xf32>
    tpu.vector_store %arg7[%c0_14, %c16], %71 {strides = array<i32>} : memref<33x64xf32, #tpu.memory_space<vmem>>, vector<33x8xf32>,
    %c3_i32 = arith.constant 3 : i32
    %73 = arith.addi %4, %c3_i32 : i32
    %74 = arith.sitofp %73 : i32 to f32
    %75 = arith.index_cast %73 : i32 to index
    %76 = memref.load %arg2[%75] : memref<8xf32, #tpu.memory_space<smem>>
    %77 = vector.broadcast %74 : f32 to vector<1x8xf32>
    %78 = arith.subf %77, %6 : vector<1x8xf32>
    %79 = vector.broadcast %0 : f32 to vector<1x8xf32>
    %80 = arith.mulf %79, %78 : vector<1x8xf32>
    %81 = math.absf %80 : vector<1x8xf32>
    %cst_15 = arith.constant 1.000000e+00 : f32
    %82 = vector.broadcast %cst_15 : f32 to vector<1x8xf32>
    %83 = arith.addf %81, %82 : vector<1x8xf32>
    %84 = math.log %83 : vector<1x8xf32>
    %85 = vector.broadcast %76 : f32 to vector<33x1xf32>
    %86 = arith.mulf %1, %85 : vector<33x1xf32>
    %87 = vector.broadcast %84 : vector<1x8xf32> to vector<33x8xf32>
    %88 = vector.broadcast %86 : vector<33x1xf32> to vector<33x8xf32>
    %89 = arith.mulf %87, %88 : vector<33x8xf32>
    %90 = vector.broadcast %2 : vector<33x1xf32> to vector<33x8xf32>
    %91 = arith.addf %89, %90 : vector<33x8xf32>
    %cst_16 = arith.constant 0.000000e+00 : f32
    %92 = vector.broadcast %cst_16 : f32 to vector<33x8xf32>
    %93 = arith.maximumf %91, %92 : vector<33x8xf32>
    %c0_17 = arith.constant 0 : index
    %c24 = arith.constant 24 : index
    %94 = vector.load %arg7[%c0_17, %c24] : memref<33x64xf32, #tpu.memory_space<vmem>>, vector<33x8xf32>
    tpu.vector_store %arg7[%c0_17, %c24], %93 {strides = array<i32>} : memref<33x64xf32, #tpu.memory_space<vmem>>, vector<33x8xf32>,
    %c4_i32 = arith.constant 4 : i32
    %95 = arith.addi %4, %c4_i32 : i32
    %96 = arith.sitofp %95 : i32 to f32
    %97 = arith.index_cast %95 : i32 to index
    %98 = memref.load %arg2[%97] : memref<8xf32, #tpu.memory_space<smem>>
    %99 = vector.broadcast %96 : f32 to vector<1x8xf32>
    %100 = arith.subf %99, %6 : vector<1x8xf32>
    %101 = vector.broadcast %0 : f32 to vector<1x8xf32>
    %102 = arith.mulf %101, %100 : vector<1x8xf32>
    %103 = math.absf %102 : vector<1x8xf32>
    %cst_18 = arith.constant 1.000000e+00 : f32
    %104 = vector.broadcast %cst_18 : f32 to vector<1x8xf32>
    %105 = arith.addf %103, %104 : vector<1x8xf32>
    %106 = math.log %105 : vector<1x8xf32>
    %107 = vector.broadcast %98 : f32 to vector<33x1xf32>
    %108 = arith.mulf %1, %107 : vector<33x1xf32>
    %109 = vector.broadcast %106 : vector<1x8xf32> to vector<33x8xf32>
    %110 = vector.broadcast %108 : vector<33x1xf32> to vector<33x8xf32>
    %111 = arith.mulf %109, %110 : vector<33x8xf32>
    %112 = vector.broadcast %2 : vector<33x1xf32> to vector<33x8xf32>
    %113 = arith.addf %111, %112 : vector<33x8xf32>
    %cst_19 = arith.constant 0.000000e+00 : f32
    %114 = vector.broadcast %cst_19 : f32 to vector<33x8xf32>
    %115 = arith.maximumf %113, %114 : vector<33x8xf32>
    %c0_20 = arith.constant 0 : index
    %c32 = arith.constant 32 : index
    %116 = vector.load %arg7[%c0_20, %c32] : memref<33x64xf32, #tpu.memory_space<vmem>>, vector<33x8xf32>
    tpu.vector_store %arg7[%c0_20, %c32], %115 {strides = array<i32>} : memref<33x64xf32, #tpu.memory_space<vmem>>, vector<33x8xf32>,
    %c5_i32 = arith.constant 5 : i32
    %117 = arith.addi %4, %c5_i32 : i32
    %118 = arith.sitofp %117 : i32 to f32
    %119 = arith.index_cast %117 : i32 to index
    %120 = memref.load %arg2[%119] : memref<8xf32, #tpu.memory_space<smem>>
    %121 = vector.broadcast %118 : f32 to vector<1x8xf32>
    %122 = arith.subf %121, %6 : vector<1x8xf32>
    %123 = vector.broadcast %0 : f32 to vector<1x8xf32>
    %124 = arith.mulf %123, %122 : vector<1x8xf32>
    %125 = math.absf %124 : vector<1x8xf32>
    %cst_21 = arith.constant 1.000000e+00 : f32
    %126 = vector.broadcast %cst_21 : f32 to vector<1x8xf32>
    %127 = arith.addf %125, %126 : vector<1x8xf32>
    %128 = math.log %127 : vector<1x8xf32>
    %129 = vector.broadcast %120 : f32 to vector<33x1xf32>
    %130 = arith.mulf %1, %129 : vector<33x1xf32>
    %131 = vector.broadcast %128 : vector<1x8xf32> to vector<33x8xf32>
    %132 = vector.broadcast %130 : vector<33x1xf32> to vector<33x8xf32>
    %133 = arith.mulf %131, %132 : vector<33x8xf32>
    %134 = vector.broadcast %2 : vector<33x1xf32> to vector<33x8xf32>
    %135 = arith.addf %133, %134 : vector<33x8xf32>
    %cst_22 = arith.constant 0.000000e+00 : f32
    %136 = vector.broadcast %cst_22 : f32 to vector<33x8xf32>
    %137 = arith.maximumf %135, %136 : vector<33x8xf32>
    %c0_23 = arith.constant 0 : index
    %c40 = arith.constant 40 : index
    %138 = vector.load %arg7[%c0_23, %c40] : memref<33x64xf32, #tpu.memory_space<vmem>>, vector<33x8xf32>
    tpu.vector_store %arg7[%c0_23, %c40], %137 {strides = array<i32>} : memref<33x64xf32, #tpu.memory_space<vmem>>, vector<33x8xf32>,
    %c6_i32 = arith.constant 6 : i32
    %139 = arith.addi %4, %c6_i32 : i32
    %140 = arith.sitofp %139 : i32 to f32
    %141 = arith.index_cast %139 : i32 to index
    %142 = memref.load %arg2[%141] : memref<8xf32, #tpu.memory_space<smem>>
    %143 = vector.broadcast %140 : f32 to vector<1x8xf32>
    %144 = arith.subf %143, %6 : vector<1x8xf32>
    %145 = vector.broadcast %0 : f32 to vector<1x8xf32>
    %146 = arith.mulf %145, %144 : vector<1x8xf32>
    %147 = math.absf %146 : vector<1x8xf32>
    %cst_24 = arith.constant 1.000000e+00 : f32
    %148 = vector.broadcast %cst_24 : f32 to vector<1x8xf32>
    %149 = arith.addf %147, %148 : vector<1x8xf32>
    %150 = math.log %149 : vector<1x8xf32>
    %151 = vector.broadcast %142 : f32 to vector<33x1xf32>
    %152 = arith.mulf %1, %151 : vector<33x1xf32>
    %153 = vector.broadcast %150 : vector<1x8xf32> to vector<33x8xf32>
    %154 = vector.broadcast %152 : vector<33x1xf32> to vector<33x8xf32>
    %155 = arith.mulf %153, %154 : vector<33x8xf32>
    %156 = vector.broadcast %2 : vector<33x1xf32> to vector<33x8xf32>
    %157 = arith.addf %155, %156 : vector<33x8xf32>
    %cst_25 = arith.constant 0.000000e+00 : f32
    %158 = vector.broadcast %cst_25 : f32 to vector<33x8xf32>
    %159 = arith.maximumf %157, %158 : vector<33x8xf32>
    %c0_26 = arith.constant 0 : index
    %c48 = arith.constant 48 : index
    %160 = vector.load %arg7[%c0_26, %c48] : memref<33x64xf32, #tpu.memory_space<vmem>>, vector<33x8xf32>
    tpu.vector_store %arg7[%c0_26, %c48], %159 {strides = array<i32>} : memref<33x64xf32, #tpu.memory_space<vmem>>, vector<33x8xf32>,
    %c7_i32 = arith.constant 7 : i32
    %161 = arith.addi %4, %c7_i32 : i32
    %162 = arith.sitofp %161 : i32 to f32
    %163 = arith.index_cast %161 : i32 to index
    %164 = memref.load %arg2[%163] : memref<8xf32, #tpu.memory_space<smem>>
    %165 = vector.broadcast %162 : f32 to vector<1x8xf32>
    %166 = arith.subf %165, %6 : vector<1x8xf32>
    %167 = vector.broadcast %0 : f32 to vector<1x8xf32>
    %168 = arith.mulf %167, %166 : vector<1x8xf32>
    %169 = math.absf %168 : vector<1x8xf32>
    %cst_27 = arith.constant 1.000000e+00 : f32
    %170 = vector.broadcast %cst_27 : f32 to vector<1x8xf32>
    %171 = arith.addf %169, %170 : vector<1x8xf32>
    %172 = math.log %171 : vector<1x8xf32>
    %173 = vector.broadcast %164 : f32 to vector<33x1xf32>
    %174 = arith.mulf %1, %173 : vector<33x1xf32>
    %175 = vector.broadcast %172 : vector<1x8xf32> to vector<33x8xf32>
    %176 = vector.broadcast %174 : vector<33x1xf32> to vector<33x8xf32>
    %177 = arith.mulf %175, %176 : vector<33x8xf32>
    %178 = vector.broadcast %2 : vector<33x1xf32> to vector<33x8xf32>
    %179 = arith.addf %177, %178 : vector<33x8xf32>
    %cst_28 = arith.constant 0.000000e+00 : f32
    %180 = vector.broadcast %cst_28 : f32 to vector<33x8xf32>
    %181 = arith.maximumf %179, %180 : vector<33x8xf32>
    %c0_29 = arith.constant 0 : index
    %c56 = arith.constant 56 : index
    %182 = vector.load %arg7[%c0_29, %c56] : memref<33x64xf32, #tpu.memory_space<vmem>>, vector<33x8xf32>
    tpu.vector_store %arg7[%c0_29, %c56], %181 {strides = array<i32>} : memref<33x64xf32, #tpu.memory_space<vmem>>, vector<33x8xf32>,
    %c0_30 = arith.constant 0 : index
    %c0_31 = arith.constant 0 : index
    %183 = vector.load %arg7[%c0_30, %c0_31] : memref<33x64xf32, #tpu.memory_space<vmem>>, vector<33x64xf32>
    %cst_32 = arith.constant dense<0.000000e+00> : vector<12x64xf32>
    %184 = tpu.matmul %3, %183, %cst_32 {dimension_numbers = #tpu.dot_dimension_numbers<[1], [0], [0], [1], [0, 0, 1, 1], [], []>} : vector<12x33xf32>, vector<33x64xf32>, vector<12x64xf32> -> vector<12x64xf32>
    %c0_33 = arith.constant 0 : index
    %c0_34 = arith.constant 0 : index
    %185 = vector.load %arg6[%c0_33, %c0_34] : memref<12x64xf32, #tpu.memory_space<vmem>>, vector<12x64xf32>
    tpu.vector_store %arg6[%c0_33, %c0_34], %184 {strides = array<i32>} : memref<12x64xf32, #tpu.memory_space<vmem>>, vector<12x64xf32>,
    return
  }
  func.func @transform_0(%arg0: i32) -> i32 {
    %c0_i32 = arith.constant 0 : i32
    %c0_i32_0 = arith.constant 0 : i32
    return %c0_i32 : i32
  }
  func.func @transform_1(%arg0: i32) -> i32 {
    %c0_i32 = arith.constant 0 : i32
    %c0_i32_0 = arith.constant 0 : i32
    return %c0_i32 : i32
  }
  func.func @transform_2(%arg0: i32) -> (i32, i32) {
    %c0_i32 = arith.constant 0 : i32
    %c0_i32_0 = arith.constant 0 : i32
    %c0_i32_1 = arith.constant 0 : i32
    return %c0_i32, %c0_i32_0 : i32, i32
  }
  func.func @transform_3(%arg0: i32) -> (i32, i32) {
    %c0_i32 = arith.constant 0 : i32
    %c0_i32_0 = arith.constant 0 : i32
    %c0_i32_1 = arith.constant 0 : i32
    return %c0_i32, %c0_i32_0 : i32, i32
  }
  func.func @transform_4(%arg0: i32) -> (i32, i32) {
    %c0_i32 = arith.constant 0 : i32
    %c0_i32_0 = arith.constant 0 : i32
    %c0_i32_1 = arith.constant 0 : i32
    return %c0_i32, %c0_i32_0 : i32, i32
  }
  func.func @transform_5(%arg0: i32) -> (i32, i32) {
    %c0_i32 = arith.constant 0 : i32
    %c0_i32_0 = arith.constant 0 : i32
    return %c0_i32, %arg0 : i32, i32
  }
}

</mosaic_0001>

<llo_original>
// kernel: tpu_custom_call.1
$region0: #{tpu_custom_call.1}
  #allocation0 [shape = 'u32[]', space=smem, size = 0x4, offset = 0x4, fixed_abs, tag = 'smem constant byte address 0x4 - core index']
  #allocation1 [shape = 'u32[144,128]{1,0:T(1,128)}', space=vmem, size = 0x12000, scoped, tag = 'internal scratch']
  #allocation2 [shape = 'f32[33,64]{1,0:T(8,128)}', space=vmem, size = 0x5000, scoped, tag = 'scratch operand']
  #allocation3 [shape = 'f32[1]{0:T(128)S(6)}', space=smem, size = 0x200, scoped, tag = 'scoped memory for tpu_custom_call.1']
  %s0 = inlined_call_operand.<no memory space> [shape: f32[1], index: 0, kind: input, shape index: {}]
  %s1 = inlined_call_operand.vmem [shape: f32[8], index: 1, kind: input, shape index: {}]
  %s2 = inlined_call_operand.vmem [shape: f32[33,1], index: 2, kind: input, shape index: {}]
  %s3 = inlined_call_operand.vmem [shape: f32[33,1], index: 3, kind: input, shape index: {}]
  %s4 = inlined_call_operand.vmem [shape: f32[12,33], index: 4, kind: input, shape index: {}]
  %s5 = inlined_call_operand.hbm [shape: f32[12,64], index: 5, kind: output, shape index: {}]
  %s6 = sld [smem:[#allocation0]]
  $region34: #{tpu_custom_call.1} parent=0
    _
  %s8 = ssub.s32 1, %s6
  %s9 = scalar_select 0, %s8, %s6
  %10 = sst [smem:[#allocation3]] %s0
  $region1: #{tpu_custom_call.1} parent=0
    #allocation4 [shape = 'u8[512]{0}', space=smem, size = 0x200, scoped, tag = 'input window, operand 1, single buffered']
    #allocation5 [shape = 's32[1]{0}', space=sflag, size = 0x4, scoped, tag = 'scoped memory for tpu_custom_call.1']
    #allocation6 [shape = 's32[1]{0}', space=sflag, size = 0x4, scoped, tag = 'scoped memory for tpu_custom_call.1']
    #allocation7 [shape = 'u8[8192]{0}', space=vmem, size = 0x2000, scoped, tag = 'output window, operand 0, single buffered']
    %11 = vsyncpa [#allocation6], 0
    %12 = vsyncpa [#allocation5], 0
    // Predicated region
    $region2: #{tpu_custom_call.1} parent=1 // pred_check
      _
    $region3: #{tpu_custom_call.1} parent=1 // pred_check_branch
      %14 = sbr.rel (0) target = $region5
    $region4: #{tpu_custom_call.1} parent=1 // pred_region
      _
    $region5: #{tpu_custom_call.1} parent=1 // pred_fallthru
      _
    // Predicated region
    $region6: #{tpu_custom_call.1} parent=1 // pred_check
      _
    $region7: #{tpu_custom_call.1} parent=1 // pred_check_branch
      %16 = sbr.rel (0) target = $region9
    $region8: #{tpu_custom_call.1} parent=1 // pred_region
      %s18 = ssub.s32 16, 16
      %19 = vsyncadd [#allocation6], %s18
      %s21 = sshll.u32 %s1, 4
      %s22 = int_to_ptr.vmem [resolvable:$true] %s21
      %24 = dma.vmem_to_smem %s22, 16, [#allocation4], [#allocation6]
    $region9: #{tpu_custom_call.1} parent=1 // pred_fallthru
      _
    // Predicated region
    $region10: #{tpu_custom_call.1} parent=1 // pred_check
      _
    $region11: #{tpu_custom_call.1} parent=1 // pred_check_branch
      %26 = sbr.rel (0) target = $region13
    $region12: #{tpu_custom_call.1} parent=1 // pred_region
      _
    $region13: #{tpu_custom_call.1} parent=1 // pred_fallthru
      _
    // Predicated region
    $region14: #{tpu_custom_call.1} parent=1 // pred_check
      _
    $region15: #{tpu_custom_call.1} parent=1 // pred_check_branch
      %28 = sbr.rel (0) target = $region17
    $region16: #{tpu_custom_call.1} parent=1 // pred_region
      _
    $region17: #{tpu_custom_call.1} parent=1 // pred_fallthru
      _
    // Predicated region
    $region18: #{tpu_custom_call.1} parent=1 // pred_check
      _
    $region19: #{tpu_custom_call.1} parent=1 // pred_check_branch
      %30 = sbr.rel (0) target = $region21
    $region20: #{tpu_custom_call.1} parent=1 // pred_region
      _
    $region21: #{tpu_custom_call.1} parent=1 // pred_fallthru
      _
    // Predicated region
    $region22: #{tpu_custom_call.1} parent=1 // pred_check
      _
    $region23: #{tpu_custom_call.1} parent=1 // pred_check_branch
      %32 = sbr.rel (0) target = $region25
    $region24: #{tpu_custom_call.1} parent=1 // pred_region
      %33 = dma.done [#allocation6], 16
    $region25: #{tpu_custom_call.1} parent=1 // pred_fallthru
      _
    %34 = sfence
    %s35 = sld [smem:[#allocation3]]
    %v36 = vld [vmem:[%s2] sm:$0xff]
    %v37 = vld [vmem:[%s2 + $0x8] sm:$0xff]
    %v38 = vld [vmem:[%s2 + $0x10] sm:$0xff]
    %v39 = vld [vmem:[%s2 + $0x18] sm:$0xff]
    %v40 = vld [vmem:[%s2 + $0x20] sm:$0x1]
    %v41 = vld [vmem:[%s3] sm:$0xff]
    %v42 = vld [vmem:[%s3 + $0x8] sm:$0xff]
    %v43 = vld [vmem:[%s3 + $0x10] sm:$0xff]
    %v44 = vld [vmem:[%s3 + $0x18] sm:$0xff]
    %v45 = vld [vmem:[%s3 + $0x20] sm:$0x1]
    %v46 = vld [vmem:[%s4] sm:$0xff]
    %v47 = vld [vmem:[%s4 + $0x8] sm:$0xf]
    %s48 = smul.u32 0, 8
    %v49 = vlaneseq
    %v50 = vand.u32 %v49, 127
    %v51 = vcvt.s32.f32 %v50
    %s52 = scvt.s32.f32 %s48
    %s53 = sld [smem:[#allocation4 + %s48]]
    %v54 = vstv %s52
    %v55 = vsub.f32 %v54, %v51
    %v56 = vstv %s35
    %v57 = vmul.f32 %v56, %v55
    %v58 = vand.u32 2147483647, %v57
    %v59 = vadd.f32 %v58, 1.0
    %v60 = vlog2.pop %v59
    %v61 = vmul.f32 %v60, 0.6931472
    %v62 = vstv %s53
    %v63 = vmul.f32 %v36, %v62
    %v64 = vmul.f32 %v37, %v62
    %v65 = vmul.f32 %v38, %v62
    %v66 = vmul.f32 %v39, %v62
    %v67 = vmul.f32 %v40, %v62
    %69 = vset.pattern.permute.xlu0 0
    %70 = vperm.xlu0 %69, %v63
    %v71 = vpop.permute.xlu0 %70
    %74 = vset.pattern.permute.xlu0 0
    %75 = vperm.xlu0 %74, %v64
    %v76 = vpop.permute.xlu0 %75
    %79 = vset.pattern.permute.xlu0 0
    %80 = vperm.xlu0 %79, %v65
    %v81 = vpop.permute.xlu0 %80
    %84 = vset.pattern.permute.xlu0 0
    %85 = vperm.xlu0 %84, %v66
    %v86 = vpop.permute.xlu0 %85
    %89 = vset.pattern.permute.xlu0 0
    %90 = vperm.xlu0 %89, %v67
    %v91 = vpop.permute.xlu0 %90
    %v93 = vmul.f32 %v61, %v71
    %v94 = vmul.f32 %v61, %v76
    %v95 = vmul.f32 %v61, %v81
    %v96 = vmul.f32 %v61, %v86
    %v97 = vmul.f32 %v61, %v91
    %99 = vset.pattern.permute.xlu0 0
    %100 = vperm.xlu0 %99, %v41
    %v101 = vpop.permute.xlu0 %100
    %104 = vset.pattern.permute.xlu0 0
    %105 = vperm.xlu0 %104, %v42
    %v106 = vpop.permute.xlu0 %105
    %109 = vset.pattern.permute.xlu0 0
    %110 = vperm.xlu0 %109, %v43
    %v111 = vpop.permute.xlu0 %110
    %114 = vset.pattern.permute.xlu0 0
    %115 = vperm.xlu0 %114, %v44
    %v116 = vpop.permute.xlu0 %115
    %119 = vset.pattern.permute.xlu0 0
    %120 = vperm.xlu0 %119, %v45
    %v121 = vpop.permute.xlu0 %120
    %v123 = vadd.f32 %v93, %v101
    %v124 = vadd.f32 %v94, %v106
    %v125 = vadd.f32 %v95, %v111
    %v126 = vadd.f32 %v96, %v116
    %v127 = vadd.f32 %v97, %v121
    %v128 = vmax.f32 %v123, 0.0
    %v129 = vmax.f32 %v124, 0.0
    %v130 = vmax.f32 %v125, 0.0
    %v131 = vmax.f32 %v126, 0.0
    %v132 = vmax.f32 %v127, 0.0
    %vm133 = vcmask 64512
    %134 = vst.msk [vmem:[#allocation2] sm:$0xff] %vm133, %v128
    %135 = vst.msk [vmem:[#allocation2 + $0x8] sm:$0xff] %vm133, %v129
    %136 = vst.msk [vmem:[#allocation2 + $0x10] sm:$0xff] %vm133, %v130
    %137 = vst.msk [vmem:[#allocation2 + $0x18] sm:$0xff] %vm133, %v131
    %vm138 = vcmask 57344
    %139 = vst.msk [vmem:[#allocation2 + $0x20] sm:$0x1] %vm138, %v132
    %s140 = sadd.s32 %s48, 1
    %s141 = scvt.s32.f32 %s140
    %s142 = sld [smem:[#allocation4 + %s140]]
    %v143 = vstv %s141
    %v144 = vsub.f32 %v143, %v51
    %v145 = vmul.f32 %v56, %v144
    %v146 = vand.u32 2147483647, %v145
    %v147 = vadd.f32 %v146, 1.0
    %v148 = vlog2.pop %v147
    %v149 = vmul.f32 %v148, 0.6931472
    %v150 = vstv %s142
    %v151 = vmul.f32 %v36, %v150
    %v152 = vmul.f32 %v37, %v150
    %v153 = vmul.f32 %v38, %v150
    %v154 = vmul.f32 %v39, %v150
    %v155 = vmul.f32 %v40, %v150
    %157 = vset.pattern.permute.xlu0 0
    %158 = vperm.xlu0 %157, %v151
    %v159 = vpop.permute.xlu0 %158
    %162 = vset.pattern.permute.xlu0 0
    %163 = vperm.xlu0 %162, %v152
    %v164 = vpop.permute.xlu0 %163
    %167 = vset.pattern.permute.xlu0 0
    %168 = vperm.xlu0 %167, %v153
    %v169 = vpop.permute.xlu0 %168
    %172 = vset.pattern.permute.xlu0 0
    %173 = vperm.xlu0 %172, %v154
    %v174 = vpop.permute.xlu0 %173
    %177 = vset.pattern.permute.xlu0 0
    %178 = vperm.xlu0 %177, %v155
    %v179 = vpop.permute.xlu0 %178
    %v181 = vmul.f32 %v149, %v159
    %v182 = vmul.f32 %v149, %v164
    %v183 = vmul.f32 %v149, %v169
    %v184 = vmul.f32 %v149, %v174
    %v185 = vmul.f32 %v149, %v179
    %v186 = vadd.f32 %v181, %v101
    %v187 = vadd.f32 %v182, %v106
    %v188 = vadd.f32 %v183, %v111
    %v189 = vadd.f32 %v184, %v116
    %v190 = vadd.f32 %v185, %v121
    %v191 = vmax.f32 %v186, 0.0
    %v192 = vmax.f32 %v187, 0.0
    %v193 = vmax.f32 %v188, 0.0
    %v194 = vmax.f32 %v189, 0.0
    %v195 = vmax.f32 %v190, 0.0
    %201 = vrot.lane.b32.xlu0 %v191, 8
    %v202 = vpop.permute.xlu0 %201
    %203 = vrot.lane.b32.xlu0 %v192, 8
    %v204 = vpop.permute.xlu0 %203
    %205 = vrot.lane.b32.xlu0 %v193, 8
    %v206 = vpop.permute.xlu0 %205
    %207 = vrot.lane.b32.xlu0 %v194, 8
    %v208 = vpop.permute.xlu0 %207
    %209 = vrot.lane.b32.xlu0 %v195, 8
    %v210 = vpop.permute.xlu0 %209
    %vm216 = vcmask 130112
    %217 = vst.msk [vmem:[#allocation2] sm:$0xff] %vm216, %v202
    %218 = vst.msk [vmem:[#allocation2 + $0x8] sm:$0xff] %vm216, %v204
    %219 = vst.msk [vmem:[#allocation2 + $0x10] sm:$0xff] %vm216, %v206
    %220 = vst.msk [vmem:[#allocation2 + $0x18] sm:$0xff] %vm216, %v208
    %vm221 = vcmask 122944
    %222 = vst.msk [vmem:[#allocation2 + $0x20] sm:$0x1] %vm221, %v210
    %s223 = sadd.s32 %s48, 2
    %s224 = scvt.s32.f32 %s223
    %s225 = sld [smem:[#allocation4 + %s223]]
    %v226 = vstv %s224
    %v227 = vsub.f32 %v226, %v51
    %v228 = vmul.f32 %v56, %v227
    %v229 = vand.u32 2147483647, %v228
    %v230 = vadd.f32 %v229, 1.0
    %v231 = vlog2.pop %v230
    %v232 = vmul.f32 %v231, 0.6931472
    %v233 = vstv %s225
    %v234 = vmul.f32 %v36, %v233
    %v235 = vmul.f32 %v37, %v233
    %v236 = vmul.f32 %v38, %v233
    %v237 = vmul.f32 %v39, %v233
    %v238 = vmul.f32 %v40, %v233
    %240 = vset.pattern.permute.xlu0 0
    %241 = vperm.xlu0 %240, %v234
    %v242 = vpop.permute.xlu0 %241
    %245 = vset.pattern.permute.xlu0 0
    %246 = vperm.xlu0 %245, %v235
    %v247 = vpop.permute.xlu0 %246
    %250 = vset.pattern.permute.xlu0 0
    %251 = vperm.xlu0 %250, %v236
    %v252 = vpop.permute.xlu0 %251
    %255 = vset.pattern.permute.xlu0 0
    %256 = vperm.xlu0 %255, %v237
    %v257 = vpop.permute.xlu0 %256
    %260 = vset.pattern.permute.xlu0 0
    %261 = vperm.xlu0 %260, %v238
    %v262 = vpop.permute.xlu0 %261
    %v264 = vmul.f32 %v232, %v242
    %v265 = vmul.f32 %v232, %v247
    %v266 = vmul.f32 %v232, %v252
    %v267 = vmul.f32 %v232, %v257
    %v268 = vmul.f32 %v232, %v262
    %v269 = vadd.f32 %v264, %v101
    %v270 = vadd.f32 %v265, %v106
    %v271 = vadd.f32 %v266, %v111
    %v272 = vadd.f32 %v267, %v116
    %v273 = vadd.f32 %v268, %v121
    %v274 = vmax.f32 %v269, 0.0
    %v275 = vmax.f32 %v270, 0.0
    %v276 = vmax.f32 %v271, 0.0
    %v277 = vmax.f32 %v272, 0.0
    %v278 = vmax.f32 %v273, 0.0
    %284 = vrot.lane.b32.xlu0 %v274, 16
    %v285 = vpop.permute.xlu0 %284
    %286 = vrot.lane.b32.xlu0 %v275, 16
    %v287 = vpop.permute.xlu0 %286
    %288 = vrot.lane.b32.xlu0 %v276, 16
    %v289 = vpop.permute.xlu0 %288
    %290 = vrot.lane.b32.xlu0 %v277, 16
    %v291 = vpop.permute.xlu0 %290
    %292 = vrot.lane.b32.xlu0 %v278, 16
    %v293 = vpop.permute.xlu0 %292
    %vm299 = vcmask 195712
    %300 = vst.msk [vmem:[#allocation2] sm:$0xff] %vm299, %v285
    %301 = vst.msk [vmem:[#allocation2 + $0x8] sm:$0xff] %vm299, %v287
    %302 = vst.msk [vmem:[#allocation2 + $0x10] sm:$0xff] %vm299, %v289
    %303 = vst.msk [vmem:[#allocation2 + $0x18] sm:$0xff] %vm299, %v291
    %vm304 = vcmask 188544
    %305 = vst.msk [vmem:[#allocation2 + $0x20] sm:$0x1] %vm304, %v293
    %s306 = sadd.s32 %s48, 3
    %s307 = scvt.s32.f32 %s306
    %s308 = sld [smem:[#allocation4 + %s306]]
    %v309 = vstv %s307
    %v310 = vsub.f32 %v309, %v51
    %v311 = vmul.f32 %v56, %v310
    %v312 = vand.u32 2147483647, %v311
    %v313 = vadd.f32 %v312, 1.0
    %v314 = vlog2.pop %v313
    %v315 = vmul.f32 %v314, 0.6931472
    %v316 = vstv %s308
    %v317 = vmul.f32 %v36, %v316
    %v318 = vmul.f32 %v37, %v316
    %v319 = vmul.f32 %v38, %v316
    %v320 = vmul.f32 %v39, %v316
    %v321 = vmul.f32 %v40, %v316
    %323 = vset.pattern.permute.xlu0 0
    %324 = vperm.xlu0 %323, %v317
    %v325 = vpop.permute.xlu0 %324
    %328 = vset.pattern.permute.xlu0 0
    %329 = vperm.xlu0 %328, %v318
    %v330 = vpop.permute.xlu0 %329
    %333 = vset.pattern.permute.xlu0 0
    %334 = vperm.xlu0 %333, %v319
    %v335 = vpop.permute.xlu0 %334
    %338 = vset.pattern.permute.xlu0 0
    %339 = vperm.xlu0 %338, %v320
    %v340 = vpop.permute.xlu0 %339
    %343 = vset.pattern.permute.xlu0 0
    %344 = vperm.xlu0 %343, %v321
    %v345 = vpop.permute.xlu0 %344
    %v347 = vmul.f32 %v315, %v325
    %v348 = vmul.f32 %v315, %v330
    %v349 = vmul.f32 %v315, %v335
    %v350 = vmul.f32 %v315, %v340
    %v351 = vmul.f32 %v315, %v345
    %v352 = vadd.f32 %v347, %v101
    %v353 = vadd.f32 %v348, %v106
    %v354 = vadd.f32 %v349, %v111
    %v355 = vadd.f32 %v350, %v116
    %v356 = vadd.f32 %v351, %v121
    %v357 = vmax.f32 %v352, 0.0
    %v358 = vmax.f32 %v353, 0.0
    %v359 = vmax.f32 %v354, 0.0
    %v360 = vmax.f32 %v355, 0.0
    %v361 = vmax.f32 %v356, 0.0
    %367 = vrot.lane.b32.xlu0 %v357, 24
    %v368 = vpop.permute.xlu0 %367
    %369 = vrot.lane.b32.xlu0 %v358, 24
    %v370 = vpop.permute.xlu0 %369
    %371 = vrot.lane.b32.xlu0 %v359, 24
    %v372 = vpop.permute.xlu0 %371
    %373 = vrot.lane.b32.xlu0 %v360, 24
    %v374 = vpop.permute.xlu0 %373
    %375 = vrot.lane.b32.xlu0 %v361, 24
    %v376 = vpop.permute.xlu0 %375
    %vm382 = vcmask 261312
    %383 = vst.msk [vmem:[#allocation2] sm:$0xff] %vm382, %v368
    %384 = vst.msk [vmem:[#allocation2 + $0x8] sm:$0xff] %vm382, %v370
    %385 = vst.msk [vmem:[#allocation2 + $0x10] sm:$0xff] %vm382, %v372
    %386 = vst.msk [vmem:[#allocation2 + $0x18] sm:$0xff] %vm382, %v374
    %vm387 = vcmask 254144
    %388 = vst.msk [vmem:[#allocation2 + $0x20] sm:$0x1] %vm387, %v376
    %s389 = sadd.s32 %s48, 4
    %s390 = scvt.s32.f32 %s389
    %s391 = sld [smem:[#allocation4 + %s389]]
    %v392 = vstv %s390
    %v393 = vsub.f32 %v392, %v51
    %v394 = vmul.f32 %v56, %v393
    %v395 = vand.u32 2147483647, %v394
    %v396 = vadd.f32 %v395, 1.0
    %v397 = vlog2.pop %v396
    %v398 = vmul.f32 %v397, 0.6931472
    %v399 = vstv %s391
    %v400 = vmul.f32 %v36, %v399
    %v401 = vmul.f32 %v37, %v399
    %v402 = vmul.f32 %v38, %v399
    %v403 = vmul.f32 %v39, %v399
    %v404 = vmul.f32 %v40, %v399
    %406 = vset.pattern.permute.xlu0 0
    %407 = vperm.xlu0 %406, %v400
    %v408 = vpop.permute.xlu0 %407
    %411 = vset.pattern.permute.xlu0 0
    %412 = vperm.xlu0 %411, %v401
    %v413 = vpop.permute.xlu0 %412
    %416 = vset.pattern.permute.xlu0 0
    %417 = vperm.xlu0 %416, %v402
    %v418 = vpop.permute.xlu0 %417
    %421 = vset.pattern.permute.xlu0 0
    %422 = vperm.xlu0 %421, %v403
    %v423 = vpop.permute.xlu0 %422
    %426 = vset.pattern.permute.xlu0 0
    %427 = vperm.xlu0 %426, %v404
    %v428 = vpop.permute.xlu0 %427
    %v430 = vmul.f32 %v398, %v408
    %v431 = vmul.f32 %v398, %v413
    %v432 = vmul.f32 %v398, %v418
    %v433 = vmul.f32 %v398, %v423
    %v434 = vmul.f32 %v398, %v428
    %v435 = vadd.f32 %v430, %v101
    %v436 = vadd.f32 %v431, %v106
    %v437 = vadd.f32 %v432, %v111
    %v438 = vadd.f32 %v433, %v116
    %v439 = vadd.f32 %v434, %v121
    %v440 = vmax.f32 %v435, 0.0
    %v441 = vmax.f32 %v436, 0.0
    %v442 = vmax.f32 %v437, 0.0
    %v443 = vmax.f32 %v438, 0.0
    %v444 = vmax.f32 %v439, 0.0
    %450 = vrot.lane.b32.xlu0 %v440, 32
    %v451 = vpop.permute.xlu0 %450
    %452 = vrot.lane.b32.xlu0 %v441, 32
    %v453 = vpop.permute.xlu0 %452
    %454 = vrot.lane.b32.xlu0 %v442, 32
    %v455 = vpop.permute.xlu0 %454
    %456 = vrot.lane.b32.xlu0 %v443, 32
    %v457 = vpop.permute.xlu0 %456
    %458 = vrot.lane.b32.xlu0 %v444, 32
    %v459 = vpop.permute.xlu0 %458
    %vm465 = vcmask 326912
    %466 = vst.msk [vmem:[#allocation2] sm:$0xff] %vm465, %v451
    %467 = vst.msk [vmem:[#allocation2 + $0x8] sm:$0xff] %vm465, %v453
    %468 = vst.msk [vmem:[#allocation2 + $0x10] sm:$0xff] %vm465, %v455
    %469 = vst.msk [vmem:[#allocation2 + $0x18] sm:$0xff] %vm465, %v457
    %vm470 = vcmask 319744
    %471 = vst.msk [vmem:[#allocation2 + $0x20] sm:$0x1] %vm470, %v459
    %s472 = sadd.s32 %s48, 5
    %s473 = scvt.s32.f32 %s472
    %s474 = sld [smem:[#allocation4 + %s472]]
    %v475 = vstv %s473
    %v476 = vsub.f32 %v475, %v51
    %v477 = vmul.f32 %v56, %v476
    %v478 = vand.u32 2147483647, %v477
    %v479 = vadd.f32 %v478, 1.0
    %v480 = vlog2.pop %v479
    %v481 = vmul.f32 %v480, 0.6931472
    %v482 = vstv %s474
    %v483 = vmul.f32 %v36, %v482
    %v484 = vmul.f32 %v37, %v482
    %v485 = vmul.f32 %v38, %v482
    %v486 = vmul.f32 %v39, %v482
    %v487 = vmul.f32 %v40, %v482
    %489 = vset.pattern.permute.xlu0 0
    %490 = vperm.xlu0 %489, %v483
    %v491 = vpop.permute.xlu0 %490
    %494 = vset.pattern.permute.xlu0 0
    %495 = vperm.xlu0 %494, %v484
    %v496 = vpop.permute.xlu0 %495
    %499 = vset.pattern.permute.xlu0 0
    %500 = vperm.xlu0 %499, %v485
    %v501 = vpop.permute.xlu0 %500
    %504 = vset.pattern.permute.xlu0 0
    %505 = vperm.xlu0 %504, %v486
    %v506 = vpop.permute.xlu0 %505
    %509 = vset.pattern.permute.xlu0 0
    %510 = vperm.xlu0 %509, %v487
    %v511 = vpop.permute.xlu0 %510
    %v513 = vmul.f32 %v481, %v491
    %v514 = vmul.f32 %v481, %v496
    %v515 = vmul.f32 %v481, %v501
    %v516 = vmul.f32 %v481, %v506
    %v517 = vmul.f32 %v481, %v511
    %v518 = vadd.f32 %v513, %v101
    %v519 = vadd.f32 %v514, %v106
    %v520 = vadd.f32 %v515, %v111
    %v521 = vadd.f32 %v516, %v116
    %v522 = vadd.f32 %v517, %v121
    %v523 = vmax.f32 %v518, 0.0
    %v524 = vmax.f32 %v519, 0.0
    %v525 = vmax.f32 %v520, 0.0
    %v526 = vmax.f32 %v521, 0.0
    %v527 = vmax.f32 %v522, 0.0
    %533 = vrot.lane.b32.xlu0 %v523, 40
    %v534 = vpop.permute.xlu0 %533
    %535 = vrot.lane.b32.xlu0 %v524, 40
    %v536 = vpop.permute.xlu0 %535
    %537 = vrot.lane.b32.xlu0 %v525, 40
    %v538 = vpop.permute.xlu0 %537
    %539 = vrot.lane.b32.xlu0 %v526, 40
    %v540 = vpop.permute.xlu0 %539
    %541 = vrot.lane.b32.xlu0 %v527, 40
    %v542 = vpop.permute.xlu0 %541
    %vm548 = vcmask 392512
    %549 = vst.msk [vmem:[#allocation2] sm:$0xff] %vm548, %v534
    %550 = vst.msk [vmem:[#allocation2 + $0x8] sm:$0xff] %vm548, %v536
    %551 = vst.msk [vmem:[#allocation2 + $0x10] sm:$0xff] %vm548, %v538
    %552 = vst.msk [vmem:[#allocation2 + $0x18] sm:$0xff] %vm548, %v540
    %vm553 = vcmask 385344
    %554 = vst.msk [vmem:[#allocation2 + $0x20] sm:$0x1] %vm553, %v542
    %s555 = sadd.s32 %s48, 6
    %s556 = scvt.s32.f32 %s555
    %s557 = sld [smem:[#allocation4 + %s555]]
    %v558 = vstv %s556
    %v559 = vsub.f32 %v558, %v51
    %v560 = vmul.f32 %v56, %v559
    %v561 = vand.u32 2147483647, %v560
    %v562 = vadd.f32 %v561, 1.0
    %v563 = vlog2.pop %v562
    %v564 = vmul.f32 %v563, 0.6931472
    %v565 = vstv %s557
    %v566 = vmul.f32 %v36, %v565
    %v567 = vmul.f32 %v37, %v565
    %v568 = vmul.f32 %v38, %v565
    %v569 = vmul.f32 %v39, %v565
    %v570 = vmul.f32 %v40, %v565
    %572 = vset.pattern.permute.xlu0 0
    %573 = vperm.xlu0 %572, %v566
    %v574 = vpop.permute.xlu0 %573
    %577 = vset.pattern.permute.xlu0 0
    %578 = vperm.xlu0 %577, %v567
    %v579 = vpop.permute.xlu0 %578
    %582 = vset.pattern.permute.xlu0 0
    %583 = vperm.xlu0 %582, %v568
    %v584 = vpop.permute.xlu0 %583
    %587 = vset.pattern.permute.xlu0 0
    %588 = vperm.xlu0 %587, %v569
    %v589 = vpop.permute.xlu0 %588
    %592 = vset.pattern.permute.xlu0 0
    %593 = vperm.xlu0 %592, %v570
    %v594 = vpop.permute.xlu0 %593
    %v596 = vmul.f32 %v564, %v574
    %v597 = vmul.f32 %v564, %v579
    %v598 = vmul.f32 %v564, %v584
    %v599 = vmul.f32 %v564, %v589
    %v600 = vmul.f32 %v564, %v594
    %v601 = vadd.f32 %v596, %v101
    %v602 = vadd.f32 %v597, %v106
    %v603 = vadd.f32 %v598, %v111
    %v604 = vadd.f32 %v599, %v116
    %v605 = vadd.f32 %v600, %v121
    %v606 = vmax.f32 %v601, 0.0
    %v607 = vmax.f32 %v602, 0.0
    %v608 = vmax.f32 %v603, 0.0
    %v609 = vmax.f32 %v604, 0.0
    %v610 = vmax.f32 %v605, 0.0
    %616 = vrot.lane.b32.xlu0 %v606, 48
    %v617 = vpop.permute.xlu0 %616
    %618 = vrot.lane.b32.xlu0 %v607, 48
    %v619 = vpop.permute.xlu0 %618
    %620 = vrot.lane.b32.xlu0 %v608, 48
    %v621 = vpop.permute.xlu0 %620
    %622 = vrot.lane.b32.xlu0 %v609, 48
    %v623 = vpop.permute.xlu0 %622
    %624 = vrot.lane.b32.xlu0 %v610, 48
    %v625 = vpop.permute.xlu0 %624
    %vm631 = vcmask 458112
    %632 = vst.msk [vmem:[#allocation2] sm:$0xff] %vm631, %v617
    %633 = vst.msk [vmem:[#allocation2 + $0x8] sm:$0xff] %vm631, %v619
    %634 = vst.msk [vmem:[#allocation2 + $0x10] sm:$0xff] %vm631, %v621
    %635 = vst.msk [vmem:[#allocation2 + $0x18] sm:$0xff] %vm631, %v623
    %vm636 = vcmask 450944
    %637 = vst.msk [vmem:[#allocation2 + $0x20] sm:$0x1] %vm636, %v625
    %s638 = sadd.s32 %s48, 7
    %s639 = scvt.s32.f32 %s638
    %s640 = sld [smem:[#allocation4 + %s638]]
    %v641 = vstv %s639
    %v642 = vsub.f32 %v641, %v51
    %v643 = vmul.f32 %v56, %v642
    %v644 = vand.u32 2147483647, %v643
    %v645 = vadd.f32 %v644, 1.0
    %v646 = vlog2.pop %v645
    %v647 = vmul.f32 %v646, 0.6931472
    %v648 = vstv %s640
    %v649 = vmul.f32 %v36, %v648
    %v650 = vmul.f32 %v37, %v648
    %v651 = vmul.f32 %v38, %v648
    %v652 = vmul.f32 %v39, %v648
    %v653 = vmul.f32 %v40, %v648
    %655 = vset.pattern.permute.xlu0 0
    %656 = vperm.xlu0 %655, %v649
    %v657 = vpop.permute.xlu0 %656
    %660 = vset.pattern.permute.xlu0 0
    %661 = vperm.xlu0 %660, %v650
    %v662 = vpop.permute.xlu0 %661
    %665 = vset.pattern.permute.xlu0 0
    %666 = vperm.xlu0 %665, %v651
    %v667 = vpop.permute.xlu0 %666
    %670 = vset.pattern.permute.xlu0 0
    %671 = vperm.xlu0 %670, %v652
    %v672 = vpop.permute.xlu0 %671
    %675 = vset.pattern.permute.xlu0 0
    %676 = vperm.xlu0 %675, %v653
    %v677 = vpop.permute.xlu0 %676
    %v679 = vmul.f32 %v647, %v657
    %v680 = vmul.f32 %v647, %v662
    %v681 = vmul.f32 %v647, %v667
    %v682 = vmul.f32 %v647, %v672
    %v683 = vmul.f32 %v647, %v677
    %v684 = vadd.f32 %v679, %v101
    %v685 = vadd.f32 %v680, %v106
    %v686 = vadd.f32 %v681, %v111
    %v687 = vadd.f32 %v682, %v116
    %v688 = vadd.f32 %v683, %v121
    %v689 = vmax.f32 %v684, 0.0
    %v690 = vmax.f32 %v685, 0.0
    %v691 = vmax.f32 %v686, 0.0
    %v692 = vmax.f32 %v687, 0.0
    %v693 = vmax.f32 %v688, 0.0
    %699 = vrot.lane.b32.xlu0 %v689, 56
    %v700 = vpop.permute.xlu0 %699
    %701 = vrot.lane.b32.xlu0 %v690, 56
    %v702 = vpop.permute.xlu0 %701
    %703 = vrot.lane.b32.xlu0 %v691, 56
    %v704 = vpop.permute.xlu0 %703
    %705 = vrot.lane.b32.xlu0 %v692, 56
    %v706 = vpop.permute.xlu0 %705
    %707 = vrot.lane.b32.xlu0 %v693, 56
    %v708 = vpop.permute.xlu0 %707
    %vm714 = vcmask 523712
    %715 = vst.msk [vmem:[#allocation2] sm:$0xff] %vm714, %v700
    %716 = vst.msk [vmem:[#allocation2 + $0x8] sm:$0xff] %vm714, %v702
    %717 = vst.msk [vmem:[#allocation2 + $0x10] sm:$0xff] %vm714, %v704
    %718 = vst.msk [vmem:[#allocation2 + $0x18] sm:$0xff] %vm714, %v706
    %vm719 = vcmask 516544
    %720 = vst.msk [vmem:[#allocation2 + $0x20] sm:$0x1] %vm719, %v708
    %v721 = vld [vmem:[#allocation2] sm:$0xff]
    %v722 = vld [vmem:[#allocation2 + $0x8] sm:$0xff]
    %v723 = vld [vmem:[#allocation2 + $0x10] sm:$0xff]
    %v724 = vld [vmem:[#allocation2 + $0x18] sm:$0xff]
    %v725 = vld [vmem:[#allocation2 + $0x20] sm:$0x1]
    %vm726 = vcmask 269312
    %v728 = vsel %vm726, %v46, 0
    %v731 = vsel %vm726, %v47, 0
    %vm733 = vcmask 1040384
    %v735 = vsel %vm733, %v725, 0
    %737 = vmatprep.subr.mxu0 0.0
    %738 = vmatpush1.msra.mxu0 %v721
    %739 = vmatprep.subr.mxu0 0.0
    %740 = vmatpush1.msra.mxu0 %v722
    %741 = vmatprep.subr.mxu0 0.0
    %742 = vmatpush1.msra.mxu0 %v723
    %743 = vmatprep.subr.mxu0 0.0
    %744 = vmatpush1.msra.mxu0 %v724
    %745 = vmatprep.subr.mxu0 0.0
    %746 = vmatpush1.msra.mxu0 %v735
    %747 = vmatprep.subr.mxu0 0.0
    %748 = vmatpush1.msra.mxu0 0.0
    %749 = vmatprep.subr.mxu0 0.0
    %750 = vmatpush1.msra.mxu0 0.0
    %751 = vmatprep.subr.mxu0 0.0
    %752 = vmatpush1.msra.mxu0 0.0
    %753 = vmatprep.subr.mxu0 0.0
    %754 = vmatpush1.msra.mxu0 0.0
    %755 = vmatprep.subr.mxu0 0.0
    %756 = vmatpush1.msra.mxu0 0.0
    %757 = vmatprep.subr.mxu0 0.0
    %758 = vmatpush1.msra.mxu0 0.0
    %759 = vmatprep.subr.mxu0 0.0
    %760 = vmatpush1.msra.mxu0 0.0
    %761 = vmatprep.subr.mxu0 0.0
    %762 = vmatpush1.msra.mxu0 0.0
    %763 = vmatprep.subr.mxu0 0.0
    %764 = vmatpush1.msra.mxu0 0.0
    %765 = vmatprep.subr.mxu0 0.0
    %766 = vmatpush1.msra.mxu0 0.0
    %767 = vmatprep.subr.mxu0 0.0
    %768 = vmatpush1.msra.mxu0 0.0
    %769 = vmatprep.subr.mxu0 0.0
    %770 = vmatpush1.msra.mxu0 0.0
    %771 = vmatprep.subr.mxu0 0.0
    %772 = vmatpush1.msra.mxu0 0.0
    %773 = vmatprep.subr.mxu0 0.0
    %774 = vmatpush1.msra.mxu0 0.0
    %775 = vmatprep.subr.mxu0 0.0
    %776 = vmatpush1.msra.mxu0 0.0
    %777 = vmatprep.subr.mxu0 0.0
    %778 = vmatpush1.msra.mxu0 0.0
    %779 = vmatprep.subr.mxu0 0.0
    %780 = vmatpush1.msra.mxu0 0.0
    %781 = vmatprep.subr.mxu0 0.0
    %782 = vmatpush1.msra.mxu0 0.0
    %783 = vmatprep.subr.mxu0 0.0
    %784 = vmatpush1.msra.mxu0 0.0
    %785 = vmatprep.subr.mxu0 0.0
    %786 = vmatpush1.msra.mxu0 0.0
    %787 = vmatprep.subr.mxu0 0.0
    %788 = vmatpush1.msra.mxu0 0.0
    %789 = vmatprep.subr.mxu0 0.0
    %790 = vmatpush1.msra.mxu0 0.0
    %791 = vmatprep.subr.mxu0 0.0
    %792 = vmatpush1.msra.mxu0 0.0
    %793 = vmatprep.subr.mxu0 0.0
    %794 = vmatpush1.msra.mxu0 0.0
    %795 = vmatprep.subr.mxu0 0.0
    %796 = vmatpush1.msra.mxu0 0.0
    %797 = vmatprep.subr.mxu0 0.0
    %798 = vmatpush1.msra.mxu0 0.0
    %799 = vmatprep.subr.mxu0 0.0
    %800 = vmatpush1.msra.mxu0 0.0
    %801 = vmatprep.mubr.f32.mxu0 0.0
    %802 = vmatmul.mubr.f32.gmra.mrb[0].mxu0 %v728
    %v803 = vpop.f32.mrb[0].mxu0
    %v804 = vadd.f32 0.0, %v803
    %v805 = vpop.f32.mrb[0].mxu0
    %806 = vmatprep.mubr.f32.mxu0 0.0
    %807 = vmatmul.mubr.f32.gmra.mrb[0].mxu0 %v731
    %v808 = vpop.f32.mrb[0].mxu0
    %v809 = vadd.f32 0.0, %v808
    %v810 = vpop.f32.mrb[0].mxu0
    %811 = vdwg.mxu0
    %vm812 = vcmask 523264
    %813 = vst.msk [vmem:[#allocation7] sm:$0xff] %vm812, %v804
    %vm814 = vcmask 519168
    %815 = vst.msk [vmem:[#allocation7 + $0x8] sm:$0xf] %vm814, %v809
    // Predicated region
    $region26: #{tpu_custom_call.1} parent=1 // pred_check
      _
    $region27: #{tpu_custom_call.1} parent=1 // pred_check_branch
      %817 = sbr.rel (0) target = $region29
    $region28: #{tpu_custom_call.1} parent=1 // pred_region
      %s819 = ssub.s32 256, 256
      %820 = vsyncadd [#allocation5], %s819
      %s821 = sshll.u32 [#allocation7], 4
      %s822 = int_to_ptr.vmem [resolvable:$true] %s821
      %827 = dma.vmem_to_hbm [thread:$0]  %s822, 256, %s5, [#allocation5], 128, 128, 8
    $region29: #{tpu_custom_call.1} parent=1 // pred_fallthru
      _
    // Predicated region
    $region30: #{tpu_custom_call.1} parent=1 // pred_check
      _
    $region31: #{tpu_custom_call.1} parent=1 // pred_check_branch
      %829 = sbr.rel (0) target = $region33
    $region32: #{tpu_custom_call.1} parent=1 // pred_region
      %830 = dma.done [#allocation5], 256
    $region33: #{tpu_custom_call.1} parent=1 // pred_fallthru
      _
    %831 = vsyncpa [#allocation5], 1
    %832 = vsyncpa [#allocation6], 1

</llo_original>
